<compile_context>
chip_gen: v6e
topology: v6e:2x2x1
jax: 0.10.0
libtpu: 0.0.40
codegen_flags: <defaults>
</compile_context>

<pallas_src>
import functools
import math

import jax
import jax.numpy as jnp
from jax import lax
from jax.experimental import pallas as pl
from jax.experimental.pallas import tpu as pltpu


def _vmem_capacity_bytes():
    """Physical VMEM capacity for the current TPU generation (conservative fallback)."""
    try:
        info = pltpu.get_tpu_info()
        cap = getattr(info, "vmem_capacity_bytes", None)
        if cap:
            return int(cap)
    except Exception:
        pass
    return 64 * 1024 * 1024  # v7x size; safe lower bound for v5e/v6e (128 MiB)


def _sdpa_kernel(q_ref, k_ref, v_ref, out_ref, attn_ref, *, scale, mxu_dtype):
    # q_ref: (Gh, Tq, D); k_ref/v_ref: (Gh, S, D); out_ref: (Gh, Tq, D); attn_ref: (Gh, Tq, S)
    op_dtype = mxu_dtype if mxu_dtype is not None else k_ref.dtype
    q = (q_ref[...].astype(jnp.float32) * scale).astype(op_dtype)  # fold 1/sqrt(D) into q
    k = k_ref[...].astype(op_dtype)
    v = v_ref[...].astype(op_dtype)
    # QK^T with no explicit transpose: contract the last axis of both operands.
    scores = lax.dot_general(
        q, k, dimension_numbers=(((2,), (2,)), ((0,), (0,))),
        preferred_element_type=jnp.float32)                        # (Gh, Tq, S)
    m = jnp.max(scores, axis=-1, keepdims=True)
    e = jnp.exp(scores - m)
    denom = jnp.sum(e, axis=-1, keepdims=True)
    p = e * pl.reciprocal(denom)                                    # 1 recip/row, not S divides
    attn_ref[...] = p.astype(attn_ref.dtype)
    out = lax.dot_general(
        p.astype(op_dtype), v, dimension_numbers=(((2,), (1,)), ((0,), (0,))),
        preferred_element_type=jnp.float32)                         # (Gh, Tq, D)
    out_ref[...] = out.astype(out_ref.dtype)


def _sdpa_kernel_masked(q_ref, k_ref, v_ref, mask_ref, out_ref, attn_ref, *, scale, mxu_dtype):
    op_dtype = mxu_dtype if mxu_dtype is not None else k_ref.dtype
    q = (q_ref[...].astype(jnp.float32) * scale).astype(op_dtype)
    k = k_ref[...].astype(op_dtype)
    v = v_ref[...].astype(op_dtype)
    keep = mask_ref[...]                                            # (1, Tq, S) int8 0/1 indicator
    scores = lax.dot_general(
        q, k, dimension_numbers=(((2,), (2,)), ((0,), (0,))),
        preferred_element_type=jnp.float32)
    # Exact masked_fill(mask == 0, -1e10) semantics (preserves reference parity).
    scores = jnp.where(keep == 0, jnp.float32(-10000000000.0), scores)
    m = jnp.max(scores, axis=-1, keepdims=True)
    e = jnp.exp(scores - m)
    denom = jnp.sum(e, axis=-1, keepdims=True)
    p = e * pl.reciprocal(denom)
    attn_ref[...] = p.astype(attn_ref.dtype)
    out = lax.dot_general(
        p.astype(op_dtype), v, dimension_numbers=(((2,), (1,)), ((0,), (0,))),
        preferred_element_type=jnp.float32)
    out_ref[...] = out.astype(out_ref.dtype)


def _pick_tiles(BH, S, D, in_itemsize, out_itemsize, attn_itemsize,
                has_mask, per_head_mask, budget):
    """Pick (heads-per-step Gh, query tile Tq) under the generation-aware VMEM budget."""
    # Query-tile candidates: full S, or sublane-aligned divisors of S.
    tq_cands = [S] + [t for t in (2048, 1024, 512, 256, 128, 64, 32, 16, 8)
                      if t < S and S % t == 0]
    # Heads per grid step: sized purely by the VMEM budget.  Per-head masks force Gh=1
    # (mask index_map addresses individual heads); cap at BH//2 so the bh grid axis
    # keeps >= 2 entries for megacore sharding on v7x (harmless on 1-TC chips).
    if has_mask and per_head_mask:
        max_gh = 1
    else:
        max_gh = BH if BH < 2 else max(1, BH // 2)
    ghs = [g for g in range(max_gh, 0, -1) if BH % g == 0]

    def est_bytes(gh, tq):
        b = 2 * ((gh * tq * D + 2 * gh * S * D) * in_itemsize    # q + k + v (double-buffered)
                 + gh * tq * D * out_itemsize                    # out block
                 + gh * tq * S * attn_itemsize)                  # attn block
        if has_mask:
            b += 2 * tq * S * 1                                  # int8 mask block
        return b

    best = None
    for gh in ghs:
        for tq in tq_cands:
            e = est_bytes(gh, tq)
            if e > budget:
                continue
            steps = (BH // gh) * (S // tq)
            key = (steps, -tq, -gh)
            if best is None or key < best[0]:
                best = (key, gh, tq, e)
    if best is None:
        gh, tq = 1, tq_cands[-1]
        return gh, tq, est_bytes(gh, tq)
    return best[1], best[2], best[3]


def scale_dot_product_attention(q, k, v, mask=None, *, mxu_dtype=None, attn_dtype=None):
    """Pallas implementation of ScaleDotProductAttention.forward.

    q, k, v: (B, H, S, D).  mask (optional): broadcastable to (B, H, S, S); positions
    where mask == 0 are filled with -1e10 before the softmax.
    Returns (result (B, H, S, D), attention_score (B, H, S, S)).

    Optional (accuracy-trading, opt-in) knobs:
      mxu_dtype:  cast matmul operands (e.g. jnp.bfloat16) for native MXU throughput.
      attn_dtype: dtype of the returned attention matrix (defaults to q.dtype).
    """
    B, H, S, D = q.shape
    BH = B * H
    scale = 1.0 / math.sqrt(D)
    attn_dtype = attn_dtype if attn_dtype is not None else q.dtype

    qf = q.reshape(BH, S, D)
    kf = k.reshape(BH, S, D)
    vf = v.reshape(BH, S, D)

    has_mask = mask is not None
    per_head_mask = False
    mflat = None
    Bm = Hm = 1
    if has_mask:
        m = jnp.asarray(mask)
        m = jnp.broadcast_to(m, jnp.broadcast_shapes(m.shape, (1, 1, S, S)))
        Bm, Hm = m.shape[0], m.shape[1]
        per_head_mask = (Bm * Hm) > 1
        # int8 0/1 indicator (matches masked_fill(mask == 0) semantics, 4x less traffic).
        mflat = (m != 0).astype(jnp.int8).reshape(Bm * Hm, S, S)

    cap = _vmem_capacity_bytes()
    budget = int(cap * 0.75)
    in_itemsize = jnp.dtype(q.dtype).itemsize
    out_itemsize = jnp.dtype(q.dtype).itemsize
    attn_itemsize = jnp.dtype(attn_dtype).itemsize
    Gh, Tq, est = _pick_tiles(BH, S, D, in_itemsize, out_itemsize, attn_itemsize,
                              has_mask, per_head_mask, budget)
    n_bh = BH // Gh
    n_q = S // Tq

    q_spec = pl.BlockSpec((Gh, Tq, D), lambda i, j: (i, j, 0))
    kv_spec = pl.BlockSpec((Gh, S, D), lambda i, j: (i, 0, 0))   # resident across q tiles
    out_spec = pl.BlockSpec((Gh, Tq, D), lambda i, j: (i, j, 0))
    attn_spec = pl.BlockSpec((Gh, Tq, S), lambda i, j: (i, j, 0))

    out_shapes = (
        jax.ShapeDtypeStruct((BH, S, D), q.dtype),
        jax.ShapeDtypeStruct((BH, S, S), attn_dtype),
    )

    # Raise the scoped-VMEM limit whenever we exceed the smallest default (16 MiB on v5e),
    # leaving >= 8 MiB of physical headroom for compiler-internal scratch.
    vmem_limit = None
    if est > 16 * 1024 * 1024:
        vmem_limit = int(min(est + (8 << 20), cap - (8 << 20)))
    # bh axis "parallel" (megacore shards over head groups), inner q axis "arbitrary"
    # so per-core K/V residency is preserved.
    compiler_params = pltpu.CompilerParams(
        dimension_semantics=("parallel", "arbitrary"),
        vmem_limit_bytes=vmem_limit)

    if not has_mask:
        out, attn = pl.pallas_call(
            functools.partial(_sdpa_kernel, scale=scale, mxu_dtype=mxu_dtype),
            out_shape=out_shapes,
            grid_spec=pltpu.PrefetchScalarGridSpec(
                num_scalar_prefetch=0,
                grid=(n_bh, n_q),
                in_specs=[q_spec, kv_spec, kv_spec],
                out_specs=[out_spec, attn_spec]),
            compiler_params=compiler_params,
        )(qf, kf, vf)
    else:
        if not per_head_mask:
            # Single shared (S, S) mask: reuse one HBM block for every head group.
            mask_spec = pl.BlockSpec((1, Tq, S), lambda i, j: (0, j, 0))
        else:
            # Gh == 1 here, so grid axis 0 indexes (b, h) heads directly;
            # map to the mask's un-broadcast layout without materializing BH copies.
            if Bm > 1 and Hm > 1:
                midx = lambda i: i
            elif Bm > 1:
                midx = lambda i: i // H
            else:
                midx = lambda i: i % H
            mask_spec = pl.BlockSpec((1, Tq, S), lambda i, j: (midx(i), j, 0))
        out, attn = pl.pallas_call(
            functools.partial(_sdpa_kernel_masked, scale=scale, mxu_dtype=mxu_dtype),
            out_shape=out_shapes,
            grid_spec=pltpu.PrefetchScalarGridSpec(
                num_scalar_prefetch=0,
                grid=(n_bh, n_q),
                in_specs=[q_spec, kv_spec, kv_spec, mask_spec],
                out_specs=[out_spec, attn_spec]),
            compiler_params=compiler_params,
        )(qf, kf, vf, mflat)

    return out.reshape(B, H, S, D), attn.reshape(B, H, S, S)


def _reference(q, k, v, mask=None):
    D = q.shape[-1]
    scores = jnp.einsum("bhqd,bhkd->bhqk", q, k) / math.sqrt(D)
    if mask is not None:
        scores = jnp.where(mask == 0, -10000000000.0, scores)
    p = jax.nn.softmax(scores, axis=-1)
    return jnp.einsum("bhqk,bhkd->bhqd", p, v), p


if __name__ == "__main__":
    B, H, S, D = 2, 4, 8, 32
    key = jax.random.PRNGKey(0)
    kq, kk, kv = jax.random.split(key, 3)
    q = jax.random.normal(kq, (B, H, S, D), dtype=jnp.float32)
    k = jax.random.normal(kk, (B, H, S, D), dtype=jnp.float32)
    v = jax.random.normal(kv, (B, H, S, D), dtype=jnp.float32)

    # Unmasked path (mask=None, matching module default).
    out, attn = scale_dot_product_attention(q, k, v)
    jax.block_until_ready((out, attn))
    ref_out, ref_attn = _reference(q, k, v)
    assert jnp.allclose(out, ref_out, atol=5e-5, rtol=5e-5)
    assert jnp.allclose(attn, ref_attn, atol=5e-5, rtol=5e-5)

    # Masked path (shared causal mask), exercising masked_fill semantics.
    causal = jnp.tril(jnp.ones((S, S), dtype=jnp.int32))[None, None]
    out_m, attn_m = scale_dot_product_attention(q, k, v, mask=causal)
    jax.block_until_ready((out_m, attn_m))
    ref_out_m, ref_attn_m = _reference(q, k, v, mask=causal)
    assert jnp.allclose(out_m, ref_out_m, atol=5e-5, rtol=5e-5)
    assert jnp.allclose(attn_m, ref_attn_m, atol=5e-5, rtol=5e-5)

    print("KERNEL_OK")
</pallas_src>

<mosaic_0001>
module attributes {stable_mosaic.version = 11 : i64} {
  func.func @_sdpa_kernel(%arg0: i32, %arg1: i32, %arg2: memref<4x8x32xf32, #tpu.memory_space<vmem>>, %arg3: memref<4x8x32xf32, #tpu.memory_space<vmem>>, %arg4: memref<4x8x32xf32, #tpu.memory_space<vmem>>, %arg5: memref<4x8x32xf32, #tpu.memory_space<vmem>>, %arg6: memref<4x8x8xf32, #tpu.memory_space<vmem>>) attributes {dimension_semantics = [#tpu.dimension_semantics<parallel>, #tpu.dimension_semantics<arbitrary>], iteration_bounds = array<i64: 2, 1>, scalar_prefetch = 0 : i64, scratch_operands = 0 : i64, tpu.core_type = #tpu.core_type<tc>, window_params = [{transform_indices = @transform_0, window_bounds = array<i64: 4, 8, 32>}, {transform_indices = @transform_1, window_bounds = array<i64: 4, 8, 32>}, {transform_indices = @transform_2, window_bounds = array<i64: 4, 8, 32>}, {transform_indices = @transform_3, window_bounds = array<i64: 4, 8, 32>}, {transform_indices = @transform_4, window_bounds = array<i64: 4, 8, 8>}]} {
    %c0 = arith.constant 0 : index
    %c0_0 = arith.constant 0 : index
    %c0_1 = arith.constant 0 : index
    %0 = vector.load %arg2[%c0, %c0_0, %c0_1] : memref<4x8x32xf32, #tpu.memory_space<vmem>>, vector<4x8x32xf32>
    %cst = arith.constant 0.176776692 : f32
    %1 = vector.broadcast %cst : f32 to vector<4x8x32xf32>
    %2 = arith.mulf %0, %1 : vector<4x8x32xf32>
    %c0_2 = arith.constant 0 : index
    %c0_3 = arith.constant 0 : index
    %c0_4 = arith.constant 0 : index
    %3 = vector.load %arg3[%c0_2, %c0_3, %c0_4] : memref<4x8x32xf32, #tpu.memory_space<vmem>>, vector<4x8x32xf32>
    %c0_5 = arith.constant 0 : index
    %c0_6 = arith.constant 0 : index
    %c0_7 = arith.constant 0 : index
    %4 = vector.load %arg4[%c0_5, %c0_6, %c0_7] : memref<4x8x32xf32, #tpu.memory_space<vmem>>, vector<4x8x32xf32>
    %cst_8 = arith.constant dense<0.000000e+00> : vector<4x8x8xf32>
    %5 = tpu.matmul %2, %3, %cst_8 {dimension_numbers = #tpu.dot_dimension_numbers<[2], [2], [1], [1], [0, 0, 0, 1, 1, 1], [0], [0]>} : vector<4x8x32xf32>, vector<4x8x32xf32>, vector<4x8x8xf32> -> vector<4x8x8xf32>
    %cst_9 = arith.constant dense<0xFF800000> : vector<4x8xf32>
    %6 = vector.multi_reduction <maximumf>, %5, %cst_9 [2] : vector<4x8x8xf32> to vector<4x8xf32>
    %7 = vector.shape_cast %6 : vector<4x8xf32> to vector<4x8x1xf32>
    %8 = vector.broadcast %7 : vector<4x8x1xf32> to vector<4x8x8xf32>
    %9 = arith.subf %5, %8 : vector<4x8x8xf32>
    %10 = math.exp %9 : vector<4x8x8xf32>
    %cst_10 = arith.constant dense<0.000000e+00> : vector<4x8xf32>
    %11 = vector.multi_reduction <add>, %10, %cst_10 [2] : vector<4x8x8xf32> to vector<4x8xf32>
    %12 = vector.shape_cast %11 : vector<4x8xf32> to vector<4x8x1xf32>
    %13 = tpu.reciprocal %12 : vector<4x8x1xf32> -> vector<4x8x1xf32>
    %14 = vector.broadcast %13 : vector<4x8x1xf32> to vector<4x8x8xf32>
    %15 = arith.mulf %10, %14 : vector<4x8x8xf32>
    %c0_11 = arith.constant 0 : index
    %c0_12 = arith.constant 0 : index
    %c0_13 = arith.constant 0 : index
    %16 = vector.load %arg6[%c0_11, %c0_12, %c0_13] : memref<4x8x8xf32, #tpu.memory_space<vmem>>, vector<4x8x8xf32>
    tpu.vector_store %arg6[%c0_11, %c0_12, %c0_13], %15 {strides = array<i32>} : memref<4x8x8xf32, #tpu.memory_space<vmem>>, vector<4x8x8xf32>,
    %cst_14 = arith.constant dense<0.000000e+00> : vector<4x8x32xf32>
    %17 = tpu.matmul %15, %4, %cst_14 {dimension_numbers = #tpu.dot_dimension_numbers<[2], [1], [1], [2], [0, 0, 0, 1, 1, 2], [0], [0]>} : vector<4x8x8xf32>, vector<4x8x32xf32>, vector<4x8x32xf32> -> vector<4x8x32xf32>
    %c0_15 = arith.constant 0 : index
    %c0_16 = arith.constant 0 : index
    %c0_17 = arith.constant 0 : index
    %18 = vector.load %arg5[%c0_15, %c0_16, %c0_17] : memref<4x8x32xf32, #tpu.memory_space<vmem>>, vector<4x8x32xf32>
    tpu.vector_store %arg5[%c0_15, %c0_16, %c0_17], %17 {strides = array<i32>} : memref<4x8x32xf32, #tpu.memory_space<vmem>>, vector<4x8x32xf32>,
    return
  }
  func.func @transform_0(%arg0: i32, %arg1: i32) -> (i32, i32, i32) {
    %c0_i32 = arith.constant 0 : i32
    %c0_i32_0 = arith.constant 0 : i32
    return %arg0, %arg1, %c0_i32 : i32, i32, i32
  }
  func.func @transform_1(%arg0: i32, %arg1: i32) -> (i32, i32, i32) {
    %c0_i32 = arith.constant 0 : i32
    %c0_i32_0 = arith.constant 0 : i32
    %c0_i32_1 = arith.constant 0 : i32
    return %arg0, %c0_i32, %c0_i32_0 : i32, i32, i32
  }
  func.func @transform_2(%arg0: i32, %arg1: i32) -> (i32, i32, i32) {
    %c0_i32 = arith.constant 0 : i32
    %c0_i32_0 = arith.constant 0 : i32
    %c0_i32_1 = arith.constant 0 : i32
    return %arg0, %c0_i32, %c0_i32_0 : i32, i32, i32
  }
  func.func @transform_3(%arg0: i32, %arg1: i32) -> (i32, i32, i32) {
    %c0_i32 = arith.constant 0 : i32
    %c0_i32_0 = arith.constant 0 : i32
    return %arg0, %arg1, %c0_i32 : i32, i32, i32
  }
  func.func @transform_4(%arg0: i32, %arg1: i32) -> (i32, i32, i32) {
    %c0_i32 = arith.constant 0 : i32
    %c0_i32_0 = arith.constant 0 : i32
    return %arg0, %arg1, %c0_i32 : i32, i32, i32
  }
}

</mosaic_0001>

<llo_original>
// kernel: tpu_custom_call.1
$region0: #{tpu_custom_call.1}
  #allocation0 [shape = 'u32[]', space=smem, size = 0x4, offset = 0x4, fixed_abs, tag = 'smem constant byte address 0x4 - core index']
  #allocation1 [shape = 'u32[144,128]{1,0:T(1,128)}', space=vmem, size = 0x12000, scoped, tag = 'internal scratch']
  %s0 = inlined_call_operand.hbm [shape: f32[8,8,32], index: 0, kind: input, shape index: {}]
  %s1 = inlined_call_operand.hbm [shape: f32[8,8,32], index: 1, kind: input, shape index: {}]
  %s2 = inlined_call_operand.hbm [shape: f32[8,8,32], index: 2, kind: input, shape index: {}]
  %s3 = inlined_call_operand.hbm [shape: f32[8,8,32], index: 3, kind: output, shape index: {0}]
  %s4 = inlined_call_operand.hbm [shape: f32[8,8,8], index: 4, kind: output, shape index: {1}]
  %5 = xla_tuple %s3, %s4
  %s6 = sld [smem:[#allocation0]]
  $region65: #{tpu_custom_call.1} parent=0
    _
  %s8 = ssub.s32 1, %s6
  %s9 = scalar_select 0, %s8, %s6
  $region1: #{tpu_custom_call.1} parent=0
    #allocation2 [shape = 'u8[32768]{0}', space=vmem, size = 0x8000, scoped, tag = 'input window, operand 0']
    #allocation3 [shape = 's32[2]{0}', space=sflag, size = 0x8, scoped, tag = 'scoped memory for tpu_custom_call.1']
    #allocation4 [shape = 's32[2]{0}', space=sflag, size = 0x8, scoped, tag = 'scoped memory for tpu_custom_call.1']
    #allocation5 [shape = 'u8[32768]{0}', space=vmem, size = 0x8000, scoped, tag = 'input window, operand 1']
    #allocation6 [shape = 's32[2]{0}', space=sflag, size = 0x8, scoped, tag = 'scoped memory for tpu_custom_call.1']
    #allocation7 [shape = 'u8[32768]{0}', space=vmem, size = 0x8000, scoped, tag = 'input window, operand 2']
    #allocation8 [shape = 'u8[32768]{0}', space=vmem, size = 0x8000, scoped, tag = 'output window, operand 0']
    #allocation9 [shape = 'u8[32768]{0}', space=vmem, size = 0x8000, scoped, tag = 'output window, operand 1']
    #allocation10 [shape = 's32[2]{0}', space=sflag, size = 0x8, scoped, tag = 'scoped memory for tpu_custom_call.1']
    %10 = vsyncpa [#allocation3], 0
    %s11 = scalar_lea.sflag [#allocation3], 1
    %12 = vsyncpa %s11, 0
    %13 = vsyncpa [#allocation6], 0
    %s14 = scalar_lea.sflag [#allocation6], 1
    %15 = vsyncpa %s14, 0
    %16 = vsyncpa [#allocation4], 0
    %s17 = scalar_lea.sflag [#allocation4], 1
    %18 = vsyncpa %s17, 0
    %19 = vsyncpa [#allocation10], 0
    %s20 = scalar_lea.sflag [#allocation10], 1
    %21 = vsyncpa %s20, 0
    loop: start=0, step=1, limit=4
    $region2: #{tpu_custom_call.1} parent=1 // loop_pre_header
      _
    $region3: #{tpu_custom_call.1} parent=1 // loop_header
      %s23 = sphi 0, %s27
      %p24 = scmp.ge.s32.totalorder %s23, 4
      %s30 = sphi 0, %s42
      %s31 = sphi 0, %s38
      %s32 = sphi 0, %s30
      %s33 = sphi 0, %s31
      %s34 = sphi 0, %s32
      %s35 = sphi 0, %s33
      %s47 = sphi 0, %s49
      %s50 = sphi 0, %s47
      %s51 = sphi 0, %s50
      %s67 = sphi 0, %s51
      %s73 = sphi 0, %s75
      %s76 = sphi 0, %s73
      %s77 = sphi 0, %s76
      %s93 = sphi 0, %s77
      %s99 = sphi 0, %s101
      %s102 = sphi 0, %s99
      %s103 = sphi 0, %s102
      %s119 = sphi 0, %s103
      %s127 = sphi 0, %s129
      %s130 = sphi 0, %s127
      %s131 = sphi 0, %s130
      %s147 = sphi 0, %s131
      %s155 = sphi 0, %s157
      %s158 = sphi 0, %s155
      %s159 = sphi 0, %s158
      %s175 = sphi 0, %s159
    $region4: #{tpu_custom_call.1} parent=1 // loop_header_branch
      %26 = sbr.rel (%p24) target = $region8
    $region5: #{tpu_custom_call.1} parent=1 // loop_body
      %s28 = ssub.s32 %s23, 1
      %s29 = ssub.s32 %s23, 2
      %s36 = sadd.s32 1, %s31
      %p37 = scmp.ge.s32.totalorder %s36, 1
      %s38 = scalar_select %p37, 0, %s36
      %s39 = sadd.s32 1, %s30
      %s40 = scalar_select %p37, %s39, %s30
      %p41 = scmp.ge.s32.totalorder %s40, 2
      %s42 = scalar_select %p41, 0, %s40
      %s43 = ssub.s32 %s30, %s42
      %s44 = ssub.s32 %s31, %s38
      %s45 = sor.u32 %s43, %s44
      %p46 = scmp.eq.s32.totalorder %s45, 0
      %s48 = sadd.s32 %s47, 1
      %s49 = scalar_select %p46, %s47, %s48
      %p52 = pneg %p46
      %p53 = scmp.eq.s32.totalorder %s23, 1
      %p54 = por %p52, %p53
      %p55 = scmp.ne.s32.totalorder %s47, %s50
      %p56 = scmp.eq.s32.totalorder %s23, 0
      %p57 = por %p55, %p56
      %p58 = scmp.ne.s32.totalorder %s47, %s50
      %p59 = scmp.eq.s32.totalorder %s28, 1
      %p60 = por %p58, %p59
      %p61 = scmp.ne.s32.totalorder %s50, %s51
      %p62 = scmp.eq.s32.totalorder %s28, 0
      %p63 = por %p61, %p62
      %p64 = scmp.ne.s32.totalorder %s50, %s51
      %p65 = scmp.eq.s32.totalorder %s29, 1
      %p66 = por %p64, %p65
      %p68 = scmp.ne.s32.totalorder %s51, %s67
      %p69 = scmp.eq.s32.totalorder %s29, 0
      %p70 = por %p68, %p69
      %s71 = ssub.s32 %s30, %s42
      %p72 = scmp.eq.s32.totalorder %s71, 0
      %s74 = sadd.s32 %s73, 1
      %s75 = scalar_select %p72, %s73, %s74
      %p78 = pneg %p72
      %p79 = scmp.eq.s32.totalorder %s23, 1
      %p80 = por %p78, %p79
      %p81 = scmp.ne.s32.totalorder %s73, %s76
      %p82 = scmp.eq.s32.totalorder %s23, 0
      %p83 = por %p81, %p82
      %p84 = scmp.ne.s32.totalorder %s73, %s76
      %p85 = scmp.eq.s32.totalorder %s28, 1
      %p86 = por %p84, %p85
      %p87 = scmp.ne.s32.totalorder %s76, %s77
      %p88 = scmp.eq.s32.totalorder %s28, 0
      %p89 = por %p87, %p88
      %p90 = scmp.ne.s32.totalorder %s76, %s77
      %p91 = scmp.eq.s32.totalorder %s29, 1
      %p92 = por %p90, %p91
      %p94 = scmp.ne.s32.totalorder %s77, %s93
      %p95 = scmp.eq.s32.totalorder %s29, 0
      %p96 = por %p94, %p95
      %s97 = ssub.s32 %s30, %s42
      %p98 = scmp.eq.s32.totalorder %s97, 0
      %s100 = sadd.s32 %s99, 1
      %s101 = scalar_select %p98, %s99, %s100
      %p104 = pneg %p98
      %p105 = scmp.eq.s32.totalorder %s23, 1
      %p106 = por %p104, %p105
      %p107 = scmp.ne.s32.totalorder %s99, %s102
      %p108 = scmp.eq.s32.totalorder %s23, 0
      %p109 = por %p107, %p108
      %p110 = scmp.ne.s32.totalorder %s99, %s102
      %p111 = scmp.eq.s32.totalorder %s28, 1
      %p112 = por %p110, %p111
      %p113 = scmp.ne.s32.totalorder %s102, %s103
      %p114 = scmp.eq.s32.totalorder %s28, 0
      %p115 = por %p113, %p114
      %p116 = scmp.ne.s32.totalorder %s102, %s103
      %p117 = scmp.eq.s32.totalorder %s29, 1
      %p118 = por %p116, %p117
      %p120 = scmp.ne.s32.totalorder %s103, %s119
      %p121 = scmp.eq.s32.totalorder %s29, 0
      %p122 = por %p120, %p121
      %s123 = ssub.s32 %s30, %s42
      %s124 = ssub.s32 %s31, %s38
      %s125 = sor.u32 %s123, %s124
      %p126 = scmp.eq.s32.totalorder %s125, 0
      %s128 = sadd.s32 %s127, 1
      %s129 = scalar_select %p126, %s127, %s128
      %p132 = pneg %p126
      %p133 = scmp.eq.s32.totalorder %s23, 1
      %p134 = por %p132, %p133
      %p135 = scmp.ne.s32.totalorder %s127, %s130
      %p136 = scmp.eq.s32.totalorder %s23, 0
      %p137 = por %p135, %p136
      %p138 = scmp.ne.s32.totalorder %s127, %s130
      %p139 = scmp.eq.s32.totalorder %s28, 1
      %p140 = por %p138, %p139
      %p141 = scmp.ne.s32.totalorder %s130, %s131
      %p142 = scmp.eq.s32.totalorder %s28, 0
      %p143 = por %p141, %p142
      %p144 = scmp.ne.s32.totalorder %s130, %s131
      %p145 = scmp.eq.s32.totalorder %s29, 1
      %p146 = por %p144, %p145
      %p148 = scmp.ne.s32.totalorder %s131, %s147
      %p149 = scmp.eq.s32.totalorder %s29, 0
      %p150 = por %p148, %p149
      %s151 = ssub.s32 %s30, %s42
      %s152 = ssub.s32 %s31, %s38
      %s153 = sor.u32 %s151, %s152
      %p154 = scmp.eq.s32.totalorder %s153, 0
      %s156 = sadd.s32 %s155, 1
      %s157 = scalar_select %p154, %s155, %s156
      %p160 = pneg %p154
      %p161 = scmp.eq.s32.totalorder %s23, 1
      %p162 = por %p160, %p161
      %p163 = scmp.ne.s32.totalorder %s155, %s158
      %p164 = scmp.eq.s32.totalorder %s23, 0
      %p165 = por %p163, %p164
      %p166 = scmp.ne.s32.totalorder %s155, %s158
      %p167 = scmp.eq.s32.totalorder %s28, 1
      %p168 = por %p166, %p167
      %p169 = scmp.ne.s32.totalorder %s158, %s159
      %p170 = scmp.eq.s32.totalorder %s28, 0
      %p171 = por %p169, %p170
      %p172 = scmp.ne.s32.totalorder %s158, %s159
      %p173 = scmp.eq.s32.totalorder %s29, 1
      %p174 = por %p172, %p173
      %p176 = scmp.ne.s32.totalorder %s159, %s175
      %p177 = scmp.eq.s32.totalorder %s29, 0
      %p178 = por %p176, %p177
      %p179 = scmp.le.s32.totalorder 1, %s23
      %p180 = scmp.lt.s32.totalorder %s23, 3
      %p181 = pnand %p179, %p180
      %p182 = pneg %p181
      // Predicated region
      $region9: #{tpu_custom_call.1} parent=5 // pred_check
        _
      $region10: #{tpu_custom_call.1} parent=5 // pred_check_branch
        %184 = sbr.rel (%p181) target = $region12
      $region11: #{tpu_custom_call.1} parent=5 // pred_region
        %s185 = ssub.s32 %s23, 1
      $region12: #{tpu_custom_call.1} parent=5 // pred_fallthru
        _
      %p186 = scmp.lt.s32.totalorder %s23, 2
      // Predicated region
      $region13: #{tpu_custom_call.1} parent=5 // pred_check
        %p187 = pneg %p186
      $region14: #{tpu_custom_call.1} parent=5 // pred_check_branch
        %189 = sbr.rel (%p187) target = $region16
      $region15: #{tpu_custom_call.1} parent=5 // pred_region
        // Predicated region
        $region17: #{tpu_custom_call.1} parent=15 // pred_check
          %p190 = pneg %p57
        $region18: #{tpu_custom_call.1} parent=15 // pred_check_branch
          %192 = sbr.rel (%p190) target = $region20
        $region19: #{tpu_custom_call.1} parent=15 // pred_region
          %s193 = sand.u32 %s47, 1
          %s194 = scalar_lea.sflag [#allocation3], %s193
          %s195 = sand.u32 %s47, 1
          %s196 = smul.addr %s195, 32
          %s197 = scalar_lea.vmem [#allocation2], %s196
          %s198 = smul.u32 4, %s30
          %s200 = ssub.s32 512, 512
          %201 = vsyncadd %s194, %s200
          %s202 = sadd.s32 %s31, %s198
          %s203 = smul.addr %s202, 128
          %s204 = scalar_lea.hbm %s0, %s203
          %s205 = sshll.u32 %s197, 4
          %s206 = int_to_ptr.vmem [resolvable:$true] %s205
          %211 = dma.hbm_to_vmem [thread:$0]  %s204, 512, %s206, %s194, 128, 128, 8
        $region20: #{tpu_custom_call.1} parent=15 // pred_fallthru
          _
        // Predicated region
        $region21: #{tpu_custom_call.1} parent=15 // pred_check
          %p212 = pneg %p83
        $region22: #{tpu_custom_call.1} parent=15 // pred_check_branch
          %214 = sbr.rel (%p212) target = $region24
        $region23: #{tpu_custom_call.1} parent=15 // pred_region
          %s215 = sand.u32 %s23, 1
          %s216 = scalar_lea.sflag [#allocation6], %s215
          %s217 = sand.u32 %s73, 1
          %s218 = smul.addr %s217, 32
          %s219 = scalar_lea.vmem [#allocation5], %s218
          %s220 = smul.u32 4, %s30
          %s222 = ssub.s32 512, 512
          %223 = vsyncadd %s216, %s222
          %s224 = smul.addr %s220, 128
          %s225 = scalar_lea.hbm %s1, %s224
          %s226 = sshll.u32 %s219, 4
          %s227 = int_to_ptr.vmem [resolvable:$true] %s226
          %232 = dma.hbm_to_vmem [thread:$0]  %s225, 512, %s227, %s216, 128, 128, 8
        $region24: #{tpu_custom_call.1} parent=15 // pred_fallthru
          _
        // Predicated region
        $region25: #{tpu_custom_call.1} parent=15 // pred_check
          %p233 = pneg %p109
        $region26: #{tpu_custom_call.1} parent=15 // pred_check_branch
          %235 = sbr.rel (%p233) target = $region28
        $region27: #{tpu_custom_call.1} parent=15 // pred_region
          %s236 = sand.u32 %s23, 1
          %s237 = scalar_lea.sflag [#allocation6], %s236
          %s238 = sand.u32 %s99, 1
          %s239 = smul.addr %s238, 32
          %s240 = scalar_lea.vmem [#allocation7], %s239
          %s241 = smul.u32 4, %s30
          %s243 = ssub.s32 512, 512
          %244 = vsyncadd %s237, %s243
          %s245 = smul.addr %s241, 128
          %s246 = scalar_lea.hbm %s2, %s245
          %s247 = sshll.u32 %s240, 4
          %s248 = int_to_ptr.vmem [resolvable:$true] %s247
          %253 = dma.hbm_to_vmem [thread:$0]  %s246, 512, %s248, %s237, 128, 128, 8
        $region28: #{tpu_custom_call.1} parent=15 // pred_fallthru
          _
      $region16: #{tpu_custom_call.1} parent=5 // pred_fallthru
        _
      %p254 = scmp.le.s32.totalorder 1, %s23
      %p255 = scmp.lt.s32.totalorder %s23, 3
      %p256 = pnand %p254, %p255
      %p257 = pneg %p256
      // Predicated region
      $region29: #{tpu_custom_call.1} parent=5 // pred_check
        _
      $region30: #{tpu_custom_call.1} parent=5 // pred_check_branch
        %259 = sbr.rel (%p256) target = $region32
      $region31: #{tpu_custom_call.1} parent=5 // pred_region
        %s260 = ssub.s32 %s23, 1
        %s261 = sand.u32 %s50, 1
        %s262 = scalar_lea.sflag [#allocation3], %s261
        %s263 = sand.u32 %s50, 1
        %s264 = smul.addr %s263, 32
        %s265 = scalar_lea.vmem [#allocation2], %s264
        // Predicated region
        $region33: #{tpu_custom_call.1} parent=31 // pred_check
          %p266 = pneg %p63
        $region34: #{tpu_custom_call.1} parent=31 // pred_check_branch
          %268 = sbr.rel (%p266) target = $region36
        $region35: #{tpu_custom_call.1} parent=31 // pred_region
          %269 = dma.done %s262, 512
        $region36: #{tpu_custom_call.1} parent=31 // pred_fallthru
          _
        %s270 = sand.u32 %s28, 1
        %s271 = scalar_lea.sflag [#allocation6], %s270
        %s272 = sand.u32 %s76, 1
        %s273 = smul.addr %s272, 32
        %s274 = scalar_lea.vmem [#allocation5], %s273
        // Predicated region
        $region37: #{tpu_custom_call.1} parent=31 // pred_check
          %p275 = pneg %p89
        $region38: #{tpu_custom_call.1} parent=31 // pred_check_branch
          %277 = sbr.rel (%p275) target = $region40
        $region39: #{tpu_custom_call.1} parent=31 // pred_region
          %278 = dma.done %s271, 512
        $region40: #{tpu_custom_call.1} parent=31 // pred_fallthru
          _
        %s279 = sand.u32 %s28, 1
        %s280 = scalar_lea.sflag [#allocation6], %s279
        %s281 = sand.u32 %s102, 1
        %s282 = smul.addr %s281, 32
        %s283 = scalar_lea.vmem [#allocation7], %s282
        // Predicated region
        $region41: #{tpu_custom_call.1} parent=31 // pred_check
          %p284 = pneg %p115
        $region42: #{tpu_custom_call.1} parent=31 // pred_check_branch
          %286 = sbr.rel (%p284) target = $region44
        $region43: #{tpu_custom_call.1} parent=31 // pred_region
          %287 = dma.done %s280, 512
        $region44: #{tpu_custom_call.1} parent=31 // pred_fallthru
          _
        %s288 = sand.u32 %s50, 1
        %s289 = scalar_lea.sflag [#allocation3], %s288
        %s290 = sand.u32 %s50, 1
        %s291 = smul.addr %s290, 32
        %s292 = scalar_lea.vmem [#allocation2], %s291
        %p293 = pneg %p63
        %p294 = pneg %p60
        %s295 = sand.u32 %s28, 1
        %s296 = scalar_lea.sflag [#allocation6], %s295
        %s297 = sand.u32 %s76, 1
        %s298 = smul.addr %s297, 32
        %s299 = scalar_lea.vmem [#allocation5], %s298
        %p300 = pneg %p89
        %p301 = pneg %p86
        %s302 = sand.u32 %s28, 1
        %s303 = scalar_lea.sflag [#allocation6], %s302
        %s304 = sand.u32 %s102, 1
        %s305 = smul.addr %s304, 32
        %s306 = scalar_lea.vmem [#allocation7], %s305
        %p307 = pneg %p115
        %p308 = pneg %p112
        %p309 = pneg %p143
        %p310 = pneg %p140
        %s311 = sand.u32 %s130, 1
        %s312 = scalar_lea.sflag [#allocation4], %s311
        %s313 = sand.u32 %s130, 1
        %s314 = smul.addr %s313, 32
        %s315 = scalar_lea.vmem [#allocation8], %s314
        %p316 = pneg %p171
        %p317 = pneg %p168
        %s318 = sand.u32 %s158, 1
        %s319 = scalar_lea.sflag [#allocation10], %s318
        %s320 = sand.u32 %s158, 1
        %s321 = smul.addr %s320, 32
        %s322 = scalar_lea.vmem [#allocation9], %s321
        %s323 = smul.u32 4, %s32
        %s324 = smul.u32 4, %s32
        %s325 = smul.u32 4, %s32
        %s326 = smul.u32 4, %s32
        %s327 = smul.u32 4, %s32
        %v328 = vld [vmem:[%s265] sm:$0xff]
        %v329 = vld [vmem:[%s265 + $0x8] sm:$0xff]
        %v330 = vld [vmem:[%s265 + $0x10] sm:$0xff]
        %v331 = vld [vmem:[%s265 + $0x18] sm:$0xff]
        %v332 = vmul.f32 %v328, 0.17677669
        %v333 = vmul.f32 %v329, 0.17677669
        %v334 = vmul.f32 %v330, 0.17677669
        %v335 = vmul.f32 %v331, 0.17677669
        %v336 = vld [vmem:[%s274] sm:$0xff]
        %v337 = vld [vmem:[%s274 + $0x8] sm:$0xff]
        %v338 = vld [vmem:[%s274 + $0x10] sm:$0xff]
        %v339 = vld [vmem:[%s274 + $0x18] sm:$0xff]
        %v340 = vld [vmem:[%s283] sm:$0xff]
        %v341 = vld [vmem:[%s283 + $0x8] sm:$0xff]
        %v342 = vld [vmem:[%s283 + $0x10] sm:$0xff]
        %v343 = vld [vmem:[%s283 + $0x18] sm:$0xff]
        %vm344 = vcmask 261120
        %v346 = vsel %vm344, %v332, 0
        %v349 = vsel %vm344, %v336, 0
        %351 = vmatprep.subr.mxu0 0.0
        %352 = vmatpush1.xpose.msra.mxu0 0.0
        %353 = vmatprep.subr.mxu0 0.0
        %354 = vmatpush1.xpose.msra.mxu0 0.0
        %355 = vmatprep.subr.mxu0 0.0
        %356 = vmatpush1.xpose.msra.mxu0 0.0
        %357 = vmatprep.subr.mxu0 0.0
        %358 = vmatpush1.xpose.msra.mxu0 0.0
        %359 = vmatprep.subr.mxu0 0.0
        %360 = vmatpush1.xpose.msra.mxu0 0.0
        %361 = vmatprep.subr.mxu0 0.0
        %362 = vmatpush1.xpose.msra.mxu0 0.0
        %363 = vmatprep.subr.mxu0 0.0
        %364 = vmatpush1.xpose.msra.mxu0 0.0
        %365 = vmatprep.subr.mxu0 0.0
        %366 = vmatpush1.xpose.msra.mxu0 0.0
        %367 = vmatprep.subr.mxu0 0.0
        %368 = vmatpush1.xpose.msra.mxu0 0.0
        %369 = vmatprep.subr.mxu0 0.0
        %370 = vmatpush1.xpose.msra.mxu0 0.0
        %371 = vmatprep.subr.mxu0 0.0
        %372 = vmatpush1.xpose.msra.mxu0 0.0
        %373 = vmatprep.subr.mxu0 0.0
        %374 = vmatpush1.xpose.msra.mxu0 0.0
        %375 = vmatprep.subr.mxu0 0.0
        %376 = vmatpush1.xpose.msra.mxu0 0.0
        %377 = vmatprep.subr.mxu0 0.0
        %378 = vmatpush1.xpose.msra.mxu0 0.0
        %379 = vmatprep.subr.mxu0 0.0
        %380 = vmatpush1.xpose.msra.mxu0 0.0
        %381 = vmatprep.subr.mxu0 0.0
        %382 = vmatpush1.xpose.msra.mxu0 %v349
        %383 = vmatprep.subr.mxu0 0.0
        %384 = vmatpush2.xpose.msra.mxu0 0.0
        %385 = vmatprep.subr.mxu0 0.0
        %386 = vmatpush2.xpose.msra.mxu0 0.0
        %387 = vmatprep.subr.mxu0 0.0
        %388 = vmatpush2.xpose.msra.mxu0 0.0
        %389 = vmatprep.subr.mxu0 0.0
        %390 = vmatpush2.xpose.msra.mxu0 0.0
        %391 = vmatprep.subr.mxu0 0.0
        %392 = vmatpush2.xpose.msra.mxu0 0.0
        %393 = vmatprep.subr.mxu0 0.0
        %394 = vmatpush2.xpose.msra.mxu0 0.0
        %395 = vmatprep.subr.mxu0 0.0
        %396 = vmatpush2.xpose.msra.mxu0 0.0
        %397 = vmatprep.subr.mxu0 0.0
        %398 = vmatpush2.xpose.msra.mxu0 0.0
        %399 = vmatprep.subr.mxu0 0.0
        %400 = vmatpush2.xpose.msra.mxu0 0.0
        %401 = vmatprep.subr.mxu0 0.0
        %402 = vmatpush2.xpose.msra.mxu0 0.0
        %403 = vmatprep.subr.mxu0 0.0
        %404 = vmatpush2.xpose.msra.mxu0 0.0
        %405 = vmatprep.subr.mxu0 0.0
        %406 = vmatpush2.xpose.msra.mxu0 0.0
        %407 = vmatprep.subr.mxu0 0.0
        %408 = vmatpush2.xpose.msra.mxu0 0.0
        %409 = vmatprep.subr.mxu0 0.0
        %410 = vmatpush2.xpose.msra.mxu0 0.0
        %411 = vmatprep.subr.mxu0 0.0
        %412 = vmatpush2.xpose.msra.mxu0 0.0
        %413 = vmatprep.subr.mxu0 0.0
        %414 = vmatpush2.xpose.msra.mxu0 0.0
        %415 = vmatprep.mubr.f32.mxu0 0.0
        %416 = vmatmul.mubr.f32.gmra.mxu0 %v346
        %v417 = vpop.f32.mrf.mxu0
        %v418 = vadd.f32 0.0, %v417
        %v419 = vpop.f32.mrf.mxu0
        %420 = vdwg.mxu0
        %v422 = vsel %vm344, %v333, 0
        %v425 = vsel %vm344, %v337, 0
        %427 = vmatprep.subr.mxu0 0.0
        %428 = vmatpush1.xpose.msra.mxu0 0.0
        %429 = vmatprep.subr.mxu0 0.0
        %430 = vmatpush1.xpose.msra.mxu0 0.0
        %431 = vmatprep.subr.mxu0 0.0
        %432 = vmatpush1.xpose.msra.mxu0 0.0
        %433 = vmatprep.subr.mxu0 0.0
        %434 = vmatpush1.xpose.msra.mxu0 0.0
        %435 = vmatprep.subr.mxu0 0.0
        %436 = vmatpush1.xpose.msra.mxu0 0.0
        %437 = vmatprep.subr.mxu0 0.0
        %438 = vmatpush1.xpose.msra.mxu0 0.0
        %439 = vmatprep.subr.mxu0 0.0
        %440 = vmatpush1.xpose.msra.mxu0 0.0
        %441 = vmatprep.subr.mxu0 0.0
        %442 = vmatpush1.xpose.msra.mxu0 0.0
        %443 = vmatprep.subr.mxu0 0.0
        %444 = vmatpush1.xpose.msra.mxu0 0.0
        %445 = vmatprep.subr.mxu0 0.0
        %446 = vmatpush1.xpose.msra.mxu0 0.0
        %447 = vmatprep.subr.mxu0 0.0
        %448 = vmatpush1.xpose.msra.mxu0 0.0
        %449 = vmatprep.subr.mxu0 0.0
        %450 = vmatpush1.xpose.msra.mxu0 0.0
        %451 = vmatprep.subr.mxu0 0.0
        %452 = vmatpush1.xpose.msra.mxu0 0.0
        %453 = vmatprep.subr.mxu0 0.0
        %454 = vmatpush1.xpose.msra.mxu0 0.0
        %455 = vmatprep.subr.mxu0 0.0
        %456 = vmatpush1.xpose.msra.mxu0 0.0
        %457 = vmatprep.subr.mxu0 0.0
        %458 = vmatpush1.xpose.msra.mxu0 %v425
        %459 = vmatprep.subr.mxu0 0.0
        %460 = vmatpush2.xpose.msra.mxu0 0.0
        %461 = vmatprep.subr.mxu0 0.0
        %462 = vmatpush2.xpose.msra.mxu0 0.0
        %463 = vmatprep.subr.mxu0 0.0
        %464 = vmatpush2.xpose.msra.mxu0 0.0
        %465 = vmatprep.subr.mxu0 0.0
        %466 = vmatpush2.xpose.msra.mxu0 0.0
        %467 = vmatprep.subr.mxu0 0.0
        %468 = vmatpush2.xpose.msra.mxu0 0.0
        %469 = vmatprep.subr.mxu0 0.0
        %470 = vmatpush2.xpose.msra.mxu0 0.0
        %471 = vmatprep.subr.mxu0 0.0
        %472 = vmatpush2.xpose.msra.mxu0 0.0
        %473 = vmatprep.subr.mxu0 0.0
        %474 = vmatpush2.xpose.msra.mxu0 0.0
        %475 = vmatprep.subr.mxu0 0.0
        %476 = vmatpush2.xpose.msra.mxu0 0.0
        %477 = vmatprep.subr.mxu0 0.0
        %478 = vmatpush2.xpose.msra.mxu0 0.0
        %479 = vmatprep.subr.mxu0 0.0
        %480 = vmatpush2.xpose.msra.mxu0 0.0
        %481 = vmatprep.subr.mxu0 0.0
        %482 = vmatpush2.xpose.msra.mxu0 0.0
        %483 = vmatprep.subr.mxu0 0.0
        %484 = vmatpush2.xpose.msra.mxu0 0.0
        %485 = vmatprep.subr.mxu0 0.0
        %486 = vmatpush2.xpose.msra.mxu0 0.0
        %487 = vmatprep.subr.mxu0 0.0
        %488 = vmatpush2.xpose.msra.mxu0 0.0
        %489 = vmatprep.subr.mxu0 0.0
        %490 = vmatpush2.xpose.msra.mxu0 0.0
        %491 = vmatprep.mubr.f32.mxu0 0.0
        %492 = vmatmul.mubr.f32.gmra.mxu0 %v422
        %v493 = vpop.f32.mrf.mxu0
        %v494 = vadd.f32 0.0, %v493
        %v495 = vpop.f32.mrf.mxu0
        %496 = vdwg.mxu0
        %v498 = vsel %vm344, %v334, 0
        %v501 = vsel %vm344, %v338, 0
        %503 = vmatprep.subr.mxu0 0.0
        %504 = vmatpush1.xpose.msra.mxu0 0.0
        %505 = vmatprep.subr.mxu0 0.0
        %506 = vmatpush1.xpose.msra.mxu0 0.0
        %507 = vmatprep.subr.mxu0 0.0
        %508 = vmatpush1.xpose.msra.mxu0 0.0
        %509 = vmatprep.subr.mxu0 0.0
        %510 = vmatpush1.xpose.msra.mxu0 0.0
        %511 = vmatprep.subr.mxu0 0.0
        %512 = vmatpush1.xpose.msra.mxu0 0.0
        %513 = vmatprep.subr.mxu0 0.0
        %514 = vmatpush1.xpose.msra.mxu0 0.0
        %515 = vmatprep.subr.mxu0 0.0
        %516 = vmatpush1.xpose.msra.mxu0 0.0
        %517 = vmatprep.subr.mxu0 0.0
        %518 = vmatpush1.xpose.msra.mxu0 0.0
        %519 = vmatprep.subr.mxu0 0.0
        %520 = vmatpush1.xpose.msra.mxu0 0.0
        %521 = vmatprep.subr.mxu0 0.0
        %522 = vmatpush1.xpose.msra.mxu0 0.0
        %523 = vmatprep.subr.mxu0 0.0
        %524 = vmatpush1.xpose.msra.mxu0 0.0
        %525 = vmatprep.subr.mxu0 0.0
        %526 = vmatpush1.xpose.msra.mxu0 0.0
        %527 = vmatprep.subr.mxu0 0.0
        %528 = vmatpush1.xpose.msra.mxu0 0.0
        %529 = vmatprep.subr.mxu0 0.0
        %530 = vmatpush1.xpose.msra.mxu0 0.0
        %531 = vmatprep.subr.mxu0 0.0
        %532 = vmatpush1.xpose.msra.mxu0 0.0
        %533 = vmatprep.subr.mxu0 0.0
        %534 = vmatpush1.xpose.msra.mxu0 %v501
        %535 = vmatprep.subr.mxu0 0.0
        %536 = vmatpush2.xpose.msra.mxu0 0.0
        %537 = vmatprep.subr.mxu0 0.0
        %538 = vmatpush2.xpose.msra.mxu0 0.0
        %539 = vmatprep.subr.mxu0 0.0
        %540 = vmatpush2.xpose.msra.mxu0 0.0
        %541 = vmatprep.subr.mxu0 0.0
        %542 = vmatpush2.xpose.msra.mxu0 0.0
        %543 = vmatprep.subr.mxu0 0.0
        %544 = vmatpush2.xpose.msra.mxu0 0.0
        %545 = vmatprep.subr.mxu0 0.0
        %546 = vmatpush2.xpose.msra.mxu0 0.0
        %547 = vmatprep.subr.mxu0 0.0
        %548 = vmatpush2.xpose.msra.mxu0 0.0
        %549 = vmatprep.subr.mxu0 0.0
        %550 = vmatpush2.xpose.msra.mxu0 0.0
        %551 = vmatprep.subr.mxu0 0.0
        %552 = vmatpush2.xpose.msra.mxu0 0.0
        %553 = vmatprep.subr.mxu0 0.0
        %554 = vmatpush2.xpose.msra.mxu0 0.0
        %555 = vmatprep.subr.mxu0 0.0
        %556 = vmatpush2.xpose.msra.mxu0 0.0
        %557 = vmatprep.subr.mxu0 0.0
        %558 = vmatpush2.xpose.msra.mxu0 0.0
        %559 = vmatprep.subr.mxu0 0.0
        %560 = vmatpush2.xpose.msra.mxu0 0.0
        %561 = vmatprep.subr.mxu0 0.0
        %562 = vmatpush2.xpose.msra.mxu0 0.0
        %563 = vmatprep.subr.mxu0 0.0
        %564 = vmatpush2.xpose.msra.mxu0 0.0
        %565 = vmatprep.subr.mxu0 0.0
        %566 = vmatpush2.xpose.msra.mxu0 0.0
        %567 = vmatprep.mubr.f32.mxu0 0.0
        %568 = vmatmul.mubr.f32.gmra.mxu0 %v498
        %v569 = vpop.f32.mrf.mxu0
        %v570 = vadd.f32 0.0, %v569
        %v571 = vpop.f32.mrf.mxu0
        %572 = vdwg.mxu0
        %v574 = vsel %vm344, %v335, 0
        %v577 = vsel %vm344, %v339, 0
        %579 = vmatprep.subr.mxu0 0.0
        %580 = vmatpush1.xpose.msra.mxu0 0.0
        %581 = vmatprep.subr.mxu0 0.0
        %582 = vmatpush1.xpose.msra.mxu0 0.0
        %583 = vmatprep.subr.mxu0 0.0
        %584 = vmatpush1.xpose.msra.mxu0 0.0
        %585 = vmatprep.subr.mxu0 0.0
        %586 = vmatpush1.xpose.msra.mxu0 0.0
        %587 = vmatprep.subr.mxu0 0.0
        %588 = vmatpush1.xpose.msra.mxu0 0.0
        %589 = vmatprep.subr.mxu0 0.0
        %590 = vmatpush1.xpose.msra.mxu0 0.0
        %591 = vmatprep.subr.mxu0 0.0
        %592 = vmatpush1.xpose.msra.mxu0 0.0
        %593 = vmatprep.subr.mxu0 0.0
        %594 = vmatpush1.xpose.msra.mxu0 0.0
        %595 = vmatprep.subr.mxu0 0.0
        %596 = vmatpush1.xpose.msra.mxu0 0.0
        %597 = vmatprep.subr.mxu0 0.0
        %598 = vmatpush1.xpose.msra.mxu0 0.0
        %599 = vmatprep.subr.mxu0 0.0
        %600 = vmatpush1.xpose.msra.mxu0 0.0
        %601 = vmatprep.subr.mxu0 0.0
        %602 = vmatpush1.xpose.msra.mxu0 0.0
        %603 = vmatprep.subr.mxu0 0.0
        %604 = vmatpush1.xpose.msra.mxu0 0.0
        %605 = vmatprep.subr.mxu0 0.0
        %606 = vmatpush1.xpose.msra.mxu0 0.0
        %607 = vmatprep.subr.mxu0 0.0
        %608 = vmatpush1.xpose.msra.mxu0 0.0
        %609 = vmatprep.subr.mxu0 0.0
        %610 = vmatpush1.xpose.msra.mxu0 %v577
        %611 = vmatprep.subr.mxu0 0.0
        %612 = vmatpush2.xpose.msra.mxu0 0.0
        %613 = vmatprep.subr.mxu0 0.0
        %614 = vmatpush2.xpose.msra.mxu0 0.0
        %615 = vmatprep.subr.mxu0 0.0
        %616 = vmatpush2.xpose.msra.mxu0 0.0
        %617 = vmatprep.subr.mxu0 0.0
        %618 = vmatpush2.xpose.msra.mxu0 0.0
        %619 = vmatprep.subr.mxu0 0.0
        %620 = vmatpush2.xpose.msra.mxu0 0.0
        %621 = vmatprep.subr.mxu0 0.0
        %622 = vmatpush2.xpose.msra.mxu0 0.0
        %623 = vmatprep.subr.mxu0 0.0
        %624 = vmatpush2.xpose.msra.mxu0 0.0
        %625 = vmatprep.subr.mxu0 0.0
        %626 = vmatpush2.xpose.msra.mxu0 0.0
        %627 = vmatprep.subr.mxu0 0.0
        %628 = vmatpush2.xpose.msra.mxu0 0.0
        %629 = vmatprep.subr.mxu0 0.0
        %630 = vmatpush2.xpose.msra.mxu0 0.0
        %631 = vmatprep.subr.mxu0 0.0
        %632 = vmatpush2.xpose.msra.mxu0 0.0
        %633 = vmatprep.subr.mxu0 0.0
        %634 = vmatpush2.xpose.msra.mxu0 0.0
        %635 = vmatprep.subr.mxu0 0.0
        %636 = vmatpush2.xpose.msra.mxu0 0.0
        %637 = vmatprep.subr.mxu0 0.0
        %638 = vmatpush2.xpose.msra.mxu0 0.0
        %639 = vmatprep.subr.mxu0 0.0
        %640 = vmatpush2.xpose.msra.mxu0 0.0
        %641 = vmatprep.subr.mxu0 0.0
        %642 = vmatpush2.xpose.msra.mxu0 0.0
        %643 = vmatprep.mubr.f32.mxu0 0.0
        %644 = vmatmul.mubr.f32.gmra.mxu0 %v574
        %v645 = vpop.f32.mrf.mxu0
        %v646 = vadd.f32 0.0, %v645
        %v647 = vpop.f32.mrf.mxu0
        %648 = vdwg.mxu0
        %vm649 = vcmask 64512
        %v650 = vsel %vm649, %v418, -inf
        %651 = vmax.xlane.f32.xlu0 %v650
        %v652 = vpop.xlane.xlu0 %651
        %v653 = vsel %vm649, %v494, -inf
        %654 = vmax.xlane.f32.xlu0 %v653
        %v655 = vpop.xlane.xlu0 %654
        %v656 = vsel %vm649, %v570, -inf
        %657 = vmax.xlane.f32.xlu0 %v656
        %v658 = vpop.xlane.xlu0 %657
        %v659 = vsel %vm649, %v646, -inf
        %660 = vmax.xlane.f32.xlu0 %v659
        %v661 = vpop.xlane.xlu0 %660
        %v662 = vsub.f32 %v418, %v652
        %v663 = vsub.f32 %v494, %v655
        %v664 = vsub.f32 %v570, %v658
        %v665 = vsub.f32 %v646, %v661
        %v666 = vmul.f32 %v662, 1.442695
        %v667 = vpow.pop %v666
        %v668 = vmul.f32 %v663, 1.442695
        %v669 = vpow.pop %v668
        %v670 = vmul.f32 %v664, 1.442695
        %v671 = vpow.pop %v670
        %v672 = vmul.f32 %v665, 1.442695
        %v673 = vpow.pop %v672
        %v674 = vsel %vm649, %v667, 0.0
        %675 = vadd.xlane.f32.xlu0 %v674
        %v676 = vpop.xlane.xlu0 %675
        %v677 = vsel %vm649, %v669, 0.0
        %678 = vadd.xlane.f32.xlu0 %v677
        %v679 = vpop.xlane.xlu0 %678
        %v680 = vsel %vm649, %v671, 0.0
        %681 = vadd.xlane.f32.xlu0 %v680
        %v682 = vpop.xlane.xlu0 %681
        %v683 = vsel %vm649, %v673, 0.0
        %684 = vadd.xlane.f32.xlu0 %v683
        %v685 = vpop.xlane.xlu0 %684
        %v686 = vrcp.pop %v676
        %v687 = vrcp.pop %v679
        %v688 = vrcp.pop %v682
        %v689 = vrcp.pop %v685
        %v690 = vmul.f32 %v667, %v686
        %v691 = vmul.f32 %v669, %v687
        %v692 = vmul.f32 %v671, %v688
        %v693 = vmul.f32 %v673, %v689
        %694 = vst.msk [vmem:[%s322] sm:$0xff] %vm649, %v690
        %695 = vst.msk [vmem:[%s322 + $0x8] sm:$0xff] %vm649, %v691
        %696 = vst.msk [vmem:[%s322 + $0x10] sm:$0xff] %vm649, %v692
        %697 = vst.msk [vmem:[%s322 + $0x18] sm:$0xff] %vm649, %v693
        %v699 = vsel %vm649, %v690, 0
        %701 = vmatprep.subr.mxu0 0.0
        %702 = vmatpush1.msra.mxu0 0.0
        %703 = vmatprep.subr.mxu0 0.0
        %704 = vmatpush1.msra.mxu0 0.0
        %705 = vmatprep.subr.mxu0 0.0
        %706 = vmatpush1.msra.mxu0 0.0
        %707 = vmatprep.subr.mxu0 0.0
        %708 = vmatpush1.msra.mxu0 0.0
        %709 = vmatprep.subr.mxu0 0.0
        %710 = vmatpush1.msra.mxu0 0.0
        %711 = vmatprep.subr.mxu0 0.0
        %712 = vmatpush1.msra.mxu0 0.0
        %713 = vmatprep.subr.mxu0 0.0
        %714 = vmatpush1.msra.mxu0 0.0
        %715 = vmatprep.subr.mxu0 0.0
        %716 = vmatpush1.msra.mxu0 0.0
        %717 = vmatprep.subr.mxu0 0.0
        %718 = vmatpush1.msra.mxu0 0.0
        %719 = vmatprep.subr.mxu0 0.0
        %720 = vmatpush1.msra.mxu0 0.0
        %721 = vmatprep.subr.mxu0 0.0
        %722 = vmatpush1.msra.mxu0 0.0
        %723 = vmatprep.subr.mxu0 0.0
        %724 = vmatpush1.msra.mxu0 0.0
        %725 = vmatprep.subr.mxu0 0.0
        %726 = vmatpush1.msra.mxu0 0.0
        %727 = vmatprep.subr.mxu0 0.0
        %728 = vmatpush1.msra.mxu0 0.0
        %729 = vmatprep.subr.mxu0 0.0
        %730 = vmatpush1.msra.mxu0 0.0
        %731 = vmatprep.subr.mxu0 0.0
        %732 = vmatpush1.msra.mxu0 %v340
        %733 = vmatprep.subr.mxu0 0.0
        %734 = vmatpush2.msra.mxu0 0.0
        %735 = vmatprep.subr.mxu0 0.0
        %736 = vmatpush2.msra.mxu0 0.0
        %737 = vmatprep.subr.mxu0 0.0
        %738 = vmatpush2.msra.mxu0 0.0
        %739 = vmatprep.subr.mxu0 0.0
        %740 = vmatpush2.msra.mxu0 0.0
        %741 = vmatprep.subr.mxu0 0.0
        %742 = vmatpush2.msra.mxu0 0.0
        %743 = vmatprep.subr.mxu0 0.0
        %744 = vmatpush2.msra.mxu0 0.0
        %745 = vmatprep.subr.mxu0 0.0
        %746 = vmatpush2.msra.mxu0 0.0
        %747 = vmatprep.subr.mxu0 0.0
        %748 = vmatpush2.msra.mxu0 0.0
        %749 = vmatprep.subr.mxu0 0.0
        %750 = vmatpush2.msra.mxu0 0.0
        %751 = vmatprep.subr.mxu0 0.0
        %752 = vmatpush2.msra.mxu0 0.0
        %753 = vmatprep.subr.mxu0 0.0
        %754 = vmatpush2.msra.mxu0 0.0
        %755 = vmatprep.subr.mxu0 0.0
        %756 = vmatpush2.msra.mxu0 0.0
        %757 = vmatprep.subr.mxu0 0.0
        %758 = vmatpush2.msra.mxu0 0.0
        %759 = vmatprep.subr.mxu0 0.0
        %760 = vmatpush2.msra.mxu0 0.0
        %761 = vmatprep.subr.mxu0 0.0
        %762 = vmatpush2.msra.mxu0 0.0
        %763 = vmatprep.subr.mxu0 0.0
        %764 = vmatpush2.msra.mxu0 0.0
        %765 = vmatprep.mubr.f32.mxu0 0.0
        %766 = vmatmul.mubr.f32.gmra.mxu0 %v699
        %v767 = vpop.f32.mrf.mxu0
        %v768 = vadd.f32 0.0, %v767
        %v769 = vpop.f32.mrf.mxu0
        %770 = vdwg.mxu0
        %v772 = vsel %vm649, %v691, 0
        %774 = vmatprep.subr.mxu0 0.0
        %775 = vmatpush1.msra.mxu0 0.0
        %776 = vmatprep.subr.mxu0 0.0
        %777 = vmatpush1.msra.mxu0 0.0
        %778 = vmatprep.subr.mxu0 0.0
        %779 = vmatpush1.msra.mxu0 0.0
        %780 = vmatprep.subr.mxu0 0.0
        %781 = vmatpush1.msra.mxu0 0.0
        %782 = vmatprep.subr.mxu0 0.0
        %783 = vmatpush1.msra.mxu0 0.0
        %784 = vmatprep.subr.mxu0 0.0
        %785 = vmatpush1.msra.mxu0 0.0
        %786 = vmatprep.subr.mxu0 0.0
        %787 = vmatpush1.msra.mxu0 0.0
        %788 = vmatprep.subr.mxu0 0.0
        %789 = vmatpush1.msra.mxu0 0.0
        %790 = vmatprep.subr.mxu0 0.0
        %791 = vmatpush1.msra.mxu0 0.0
        %792 = vmatprep.subr.mxu0 0.0
        %793 = vmatpush1.msra.mxu0 0.0
        %794 = vmatprep.subr.mxu0 0.0
        %795 = vmatpush1.msra.mxu0 0.0
        %796 = vmatprep.subr.mxu0 0.0
        %797 = vmatpush1.msra.mxu0 0.0
        %798 = vmatprep.subr.mxu0 0.0
        %799 = vmatpush1.msra.mxu0 0.0
        %800 = vmatprep.subr.mxu0 0.0
        %801 = vmatpush1.msra.mxu0 0.0
        %802 = vmatprep.subr.mxu0 0.0
        %803 = vmatpush1.msra.mxu0 0.0
        %804 = vmatprep.subr.mxu0 0.0
        %805 = vmatpush1.msra.mxu0 %v341
        %806 = vmatprep.subr.mxu0 0.0
        %807 = vmatpush2.msra.mxu0 0.0
        %808 = vmatprep.subr.mxu0 0.0
        %809 = vmatpush2.msra.mxu0 0.0
        %810 = vmatprep.subr.mxu0 0.0
        %811 = vmatpush2.msra.mxu0 0.0
        %812 = vmatprep.subr.mxu0 0.0
        %813 = vmatpush2.msra.mxu0 0.0
        %814 = vmatprep.subr.mxu0 0.0
        %815 = vmatpush2.msra.mxu0 0.0
        %816 = vmatprep.subr.mxu0 0.0
        %817 = vmatpush2.msra.mxu0 0.0
        %818 = vmatprep.subr.mxu0 0.0
        %819 = vmatpush2.msra.mxu0 0.0
        %820 = vmatprep.subr.mxu0 0.0
        %821 = vmatpush2.msra.mxu0 0.0
        %822 = vmatprep.subr.mxu0 0.0
        %823 = vmatpush2.msra.mxu0 0.0
        %824 = vmatprep.subr.mxu0 0.0
        %825 = vmatpush2.msra.mxu0 0.0
        %826 = vmatprep.subr.mxu0 0.0
        %827 = vmatpush2.msra.mxu0 0.0
        %828 = vmatprep.subr.mxu0 0.0
        %829 = vmatpush2.msra.mxu0 0.0
        %830 = vmatprep.subr.mxu0 0.0
        %831 = vmatpush2.msra.mxu0 0.0
        %832 = vmatprep.subr.mxu0 0.0
        %833 = vmatpush2.msra.mxu0 0.0
        %834 = vmatprep.subr.mxu0 0.0
        %835 = vmatpush2.msra.mxu0 0.0
        %836 = vmatprep.subr.mxu0 0.0
        %837 = vmatpush2.msra.mxu0 0.0
        %838 = vmatprep.mubr.f32.mxu0 0.0
        %839 = vmatmul.mubr.f32.gmra.mxu0 %v772
        %v840 = vpop.f32.mrf.mxu0
        %v841 = vadd.f32 0.0, %v840
        %v842 = vpop.f32.mrf.mxu0
        %843 = vdwg.mxu0
        %v845 = vsel %vm649, %v692, 0
        %847 = vmatprep.subr.mxu0 0.0
        %848 = vmatpush1.msra.mxu0 0.0
        %849 = vmatprep.subr.mxu0 0.0
        %850 = vmatpush1.msra.mxu0 0.0
        %851 = vmatprep.subr.mxu0 0.0
        %852 = vmatpush1.msra.mxu0 0.0
        %853 = vmatprep.subr.mxu0 0.0
        %854 = vmatpush1.msra.mxu0 0.0
        %855 = vmatprep.subr.mxu0 0.0
        %856 = vmatpush1.msra.mxu0 0.0
        %857 = vmatprep.subr.mxu0 0.0
        %858 = vmatpush1.msra.mxu0 0.0
        %859 = vmatprep.subr.mxu0 0.0
        %860 = vmatpush1.msra.mxu0 0.0
        %861 = vmatprep.subr.mxu0 0.0
        %862 = vmatpush1.msra.mxu0 0.0
        %863 = vmatprep.subr.mxu0 0.0
        %864 = vmatpush1.msra.mxu0 0.0
        %865 = vmatprep.subr.mxu0 0.0
        %866 = vmatpush1.msra.mxu0 0.0
        %867 = vmatprep.subr.mxu0 0.0
        %868 = vmatpush1.msra.mxu0 0.0
        %869 = vmatprep.subr.mxu0 0.0
        %870 = vmatpush1.msra.mxu0 0.0
        %871 = vmatprep.subr.mxu0 0.0
        %872 = vmatpush1.msra.mxu0 0.0
        %873 = vmatprep.subr.mxu0 0.0
        %874 = vmatpush1.msra.mxu0 0.0
        %875 = vmatprep.subr.mxu0 0.0
        %876 = vmatpush1.msra.mxu0 0.0
        %877 = vmatprep.subr.mxu0 0.0
        %878 = vmatpush1.msra.mxu0 %v342
        %879 = vmatprep.subr.mxu0 0.0
        %880 = vmatpush2.msra.mxu0 0.0
        %881 = vmatprep.subr.mxu0 0.0
        %882 = vmatpush2.msra.mxu0 0.0
        %883 = vmatprep.subr.mxu0 0.0
        %884 = vmatpush2.msra.mxu0 0.0
        %885 = vmatprep.subr.mxu0 0.0
        %886 = vmatpush2.msra.mxu0 0.0
        %887 = vmatprep.subr.mxu0 0.0
        %888 = vmatpush2.msra.mxu0 0.0
        %889 = vmatprep.subr.mxu0 0.0
        %890 = vmatpush2.msra.mxu0 0.0
        %891 = vmatprep.subr.mxu0 0.0
        %892 = vmatpush2.msra.mxu0 0.0
        %893 = vmatprep.subr.mxu0 0.0
        %894 = vmatpush2.msra.mxu0 0.0
        %895 = vmatprep.subr.mxu0 0.0
        %896 = vmatpush2.msra.mxu0 0.0
        %897 = vmatprep.subr.mxu0 0.0
        %898 = vmatpush2.msra.mxu0 0.0
        %899 = vmatprep.subr.mxu0 0.0
        %900 = vmatpush2.msra.mxu0 0.0
        %901 = vmatprep.subr.mxu0 0.0
        %902 = vmatpush2.msra.mxu0 0.0
        %903 = vmatprep.subr.mxu0 0.0
        %904 = vmatpush2.msra.mxu0 0.0
        %905 = vmatprep.subr.mxu0 0.0
        %906 = vmatpush2.msra.mxu0 0.0
        %907 = vmatprep.subr.mxu0 0.0
        %908 = vmatpush2.msra.mxu0 0.0
        %909 = vmatprep.subr.mxu0 0.0
        %910 = vmatpush2.msra.mxu0 0.0
        %911 = vmatprep.mubr.f32.mxu0 0.0
        %912 = vmatmul.mubr.f32.gmra.mxu0 %v845
        %v913 = vpop.f32.mrf.mxu0
        %v914 = vadd.f32 0.0, %v913
        %v915 = vpop.f32.mrf.mxu0
        %916 = vdwg.mxu0
        %v918 = vsel %vm649, %v693, 0
        %920 = vmatprep.subr.mxu0 0.0
        %921 = vmatpush1.msra.mxu0 0.0
        %922 = vmatprep.subr.mxu0 0.0
        %923 = vmatpush1.msra.mxu0 0.0
        %924 = vmatprep.subr.mxu0 0.0
        %925 = vmatpush1.msra.mxu0 0.0
        %926 = vmatprep.subr.mxu0 0.0
        %927 = vmatpush1.msra.mxu0 0.0
        %928 = vmatprep.subr.mxu0 0.0
        %929 = vmatpush1.msra.mxu0 0.0
        %930 = vmatprep.subr.mxu0 0.0
        %931 = vmatpush1.msra.mxu0 0.0
        %932 = vmatprep.subr.mxu0 0.0
        %933 = vmatpush1.msra.mxu0 0.0
        %934 = vmatprep.subr.mxu0 0.0
        %935 = vmatpush1.msra.mxu0 0.0
        %936 = vmatprep.subr.mxu0 0.0
        %937 = vmatpush1.msra.mxu0 0.0
        %938 = vmatprep.subr.mxu0 0.0
        %939 = vmatpush1.msra.mxu0 0.0
        %940 = vmatprep.subr.mxu0 0.0
        %941 = vmatpush1.msra.mxu0 0.0
        %942 = vmatprep.subr.mxu0 0.0
        %943 = vmatpush1.msra.mxu0 0.0
        %944 = vmatprep.subr.mxu0 0.0
        %945 = vmatpush1.msra.mxu0 0.0
        %946 = vmatprep.subr.mxu0 0.0
        %947 = vmatpush1.msra.mxu0 0.0
        %948 = vmatprep.subr.mxu0 0.0
        %949 = vmatpush1.msra.mxu0 0.0
        %950 = vmatprep.subr.mxu0 0.0
        %951 = vmatpush1.msra.mxu0 %v343
        %952 = vmatprep.subr.mxu0 0.0
        %953 = vmatpush2.msra.mxu0 0.0
        %954 = vmatprep.subr.mxu0 0.0
        %955 = vmatpush2.msra.mxu0 0.0
        %956 = vmatprep.subr.mxu0 0.0
        %957 = vmatpush2.msra.mxu0 0.0
        %958 = vmatprep.subr.mxu0 0.0
        %959 = vmatpush2.msra.mxu0 0.0
        %960 = vmatprep.subr.mxu0 0.0
        %961 = vmatpush2.msra.mxu0 0.0
        %962 = vmatprep.subr.mxu0 0.0
        %963 = vmatpush2.msra.mxu0 0.0
        %964 = vmatprep.subr.mxu0 0.0
        %965 = vmatpush2.msra.mxu0 0.0
        %966 = vmatprep.subr.mxu0 0.0
        %967 = vmatpush2.msra.mxu0 0.0
        %968 = vmatprep.subr.mxu0 0.0
        %969 = vmatpush2.msra.mxu0 0.0
        %970 = vmatprep.subr.mxu0 0.0
        %971 = vmatpush2.msra.mxu0 0.0
        %972 = vmatprep.subr.mxu0 0.0
        %973 = vmatpush2.msra.mxu0 0.0
        %974 = vmatprep.subr.mxu0 0.0
        %975 = vmatpush2.msra.mxu0 0.0
        %976 = vmatprep.subr.mxu0 0.0
        %977 = vmatpush2.msra.mxu0 0.0
        %978 = vmatprep.subr.mxu0 0.0
        %979 = vmatpush2.msra.mxu0 0.0
        %980 = vmatprep.subr.mxu0 0.0
        %981 = vmatpush2.msra.mxu0 0.0
        %982 = vmatprep.subr.mxu0 0.0
        %983 = vmatpush2.msra.mxu0 0.0
        %984 = vmatprep.mubr.f32.mxu0 0.0
        %985 = vmatmul.mubr.f32.gmra.mxu0 %v918
        %v986 = vpop.f32.mrf.mxu0
        %v987 = vadd.f32 0.0, %v986
        %v988 = vpop.f32.mrf.mxu0
        %989 = vdwg.mxu0
        %990 = vst.msk [vmem:[%s315] sm:$0xff] %vm344, %v768
        %991 = vst.msk [vmem:[%s315 + $0x8] sm:$0xff] %vm344, %v841
        %992 = vst.msk [vmem:[%s315 + $0x10] sm:$0xff] %vm344, %v914
        %993 = vst.msk [vmem:[%s315 + $0x18] sm:$0xff] %vm344, %v987
        %s994 = sand.u32 %s130, 1
        %s995 = scalar_lea.sflag [#allocation4], %s994
        %s996 = sand.u32 %s130, 1
        %s997 = smul.addr %s996, 32
        %s998 = scalar_lea.vmem [#allocation8], %s997
        %s999 = sand.u32 %s158, 1
        %s1000 = scalar_lea.sflag [#allocation10], %s999
        %s1001 = sand.u32 %s158, 1
        %s1002 = smul.addr %s1001, 32
        %s1003 = scalar_lea.vmem [#allocation9], %s1002
        // Predicated region
        $region45: #{tpu_custom_call.1} parent=31 // pred_check
          %p1004 = pneg %p140
        $region46: #{tpu_custom_call.1} parent=31 // pred_check_branch
          %1006 = sbr.rel (%p1004) target = $region48
        $region47: #{tpu_custom_call.1} parent=31 // pred_region
          %s1007 = smul.u32 4, %s32
          %s1009 = ssub.s32 512, 512
          %1010 = vsyncadd %s995, %s1009
          %s1011 = sadd.s32 %s33, %s1007
          %s1012 = smul.addr %s1011, 128
          %s1013 = scalar_lea.hbm %s3, %s1012
          %s1014 = sshll.u32 %s998, 4
          %s1015 = int_to_ptr.vmem [resolvable:$true] %s1014
          %1020 = dma.vmem_to_hbm [thread:$0]  %s1015, 512, %s1013, %s995, 128, 128, 8
        $region48: #{tpu_custom_call.1} parent=31 // pred_fallthru
          _
        // Predicated region
        $region49: #{tpu_custom_call.1} parent=31 // pred_check
          %p1021 = pneg %p168
        $region50: #{tpu_custom_call.1} parent=31 // pred_check_branch
          %1023 = sbr.rel (%p1021) target = $region52
        $region51: #{tpu_custom_call.1} parent=31 // pred_region
          %s1024 = smul.u32 4, %s32
          %s1026 = ssub.s32 512, 512
          %1027 = vsyncadd %s1000, %s1026
          %s1028 = sadd.s32 %s33, %s1024
          %s1029 = smul.addr %s1028, 128
          %s1030 = scalar_lea.hbm %s4, %s1029
          %s1031 = sshll.u32 %s1003, 4
          %s1032 = int_to_ptr.vmem [resolvable:$true] %s1031
          %1037 = dma.vmem_to_hbm [thread:$0]  %s1032, 512, %s1030, %s1000, 128, 128, 8
        $region52: #{tpu_custom_call.1} parent=31 // pred_fallthru
          _
      $region32: #{tpu_custom_call.1} parent=5 // pred_fallthru
        _
      %p1038 = scmp.le.s32.totalorder 2, %s23
      // Predicated region
      $region53: #{tpu_custom_call.1} parent=5 // pred_check
        %p1039 = pneg %p1038
      $region54: #{tpu_custom_call.1} parent=5 // pred_check_branch
        %1041 = sbr.rel (%p1039) target = $region56
      $region55: #{tpu_custom_call.1} parent=5 // pred_region
        %s1042 = ssub.s32 %s23, 2
        // Predicated region
        $region57: #{tpu_custom_call.1} parent=55 // pred_check
          %p1043 = pneg %p146
        $region58: #{tpu_custom_call.1} parent=55 // pred_check_branch
          %1045 = sbr.rel (%p1043) target = $region60
        $region59: #{tpu_custom_call.1} parent=55 // pred_region
          %s1046 = sand.u32 %s131, 1
          %s1047 = scalar_lea.sflag [#allocation4], %s1046
          %s1048 = sand.u32 %s131, 1
          %s1049 = smul.addr %s1048, 32
          %s1050 = scalar_lea.vmem [#allocation8], %s1049
          %1051 = dma.done %s1047, 512
        $region60: #{tpu_custom_call.1} parent=55 // pred_fallthru
          _
        // Predicated region
        $region61: #{tpu_custom_call.1} parent=55 // pred_check
          %p1052 = pneg %p174
        $region62: #{tpu_custom_call.1} parent=55 // pred_check_branch
          %1054 = sbr.rel (%p1052) target = $region64
        $region63: #{tpu_custom_call.1} parent=55 // pred_region
          %s1055 = sand.u32 %s159, 1
          %s1056 = scalar_lea.sflag [#allocation10], %s1055
          %s1057 = sand.u32 %s159, 1
          %s1058 = smul.addr %s1057, 32
          %s1059 = scalar_lea.vmem [#allocation9], %s1058
          %1060 = dma.done %s1056, 512
        $region64: #{tpu_custom_call.1} parent=55 // pred_fallthru
          _
      $region56: #{tpu_custom_call.1} parent=5 // pred_fallthru
        _
    $region6: #{tpu_custom_call.1} parent=1 // loop_footer
      %s27 = sadd.s32 1, %s23
    $region7: #{tpu_custom_call.1} parent=1 // loop_footer_branch
      %22 = sbr.rel target = $region3
    $region8: #{tpu_custom_call.1} parent=1 // loop_exit
      _
    %1061 = vsyncpa [#allocation3], 1
    %s1062 = scalar_lea.sflag [#allocation3], 1
    %1063 = vsyncpa %s1062, 1
    %1064 = vsyncpa [#allocation6], 1
    %s1065 = scalar_lea.sflag [#allocation6], 1
    %1066 = vsyncpa %s1065, 1
    %1067 = vsyncpa [#allocation4], 1
    %s1068 = scalar_lea.sflag [#allocation4], 1
    %1069 = vsyncpa %s1068, 1
    %1070 = vsyncpa [#allocation10], 1
    %s1071 = scalar_lea.sflag [#allocation10], 1
    %1072 = vsyncpa %s1071, 1

</llo_original>
